<compile_context>
chip_gen: v6e
topology: v6e:2x2x1
jax: 0.10.0
libtpu: 0.0.40
codegen_flags: <defaults>
</compile_context>

<pallas_src>
import jax
import jax.numpy as jnp
from jax.experimental import pallas as pl
from jax.experimental.pallas import tpu as pltpu


def _const_embed_kernel(emb_ref, out_ref):
    # emb_ref: (1, td) chunk of the (possibly pre-tiled) embedding row.
    # out_ref: (tb, td) output block; sublane-broadcast + one dense block store.
    out_ref[...] = jnp.broadcast_to(emb_ref[...], out_ref.shape)


def _choose_widen_factor(batch, flat, itemsize, lane_budget_bytes, target_lanes):
    """Pick m | batch so each output row holds m copies of the embedding row."""
    if flat * itemsize > lane_budget_bytes:
        return 1
    m_max = min(batch, max(1, lane_budget_bytes // (flat * itemsize)))
    cands = [m for m in range(1, m_max + 1) if batch % m == 0]
    if not cands:
        return 1
    dense = [m for m in cands if (m * flat) % 128 == 0]
    if dense:
        big = [m for m in dense if m * flat >= target_lanes]
        return min(big) if big else max(dense)
    # No lane-dense width exists for this (batch, flat); widen up to
    # ~target_lanes anyway (fewer, larger masked stores still beat tiny ones).
    capped = [m for m in cands if m * flat <= max(target_lanes, flat)]
    return max(capped) if capped else 1


def _choose_lane_tile(width, itemsize, lane_budget_bytes):
    """Lane-tile a row that is too wide to keep resident in one block."""
    if width * itemsize <= lane_budget_bytes:
        return width
    max_td = max(128, (lane_budget_bytes // itemsize) // 128 * 128)
    # Prefer a 128-multiple divisor of `width` (no ragged tail block).
    k = -(-width // max_td)  # ceil(width / max_td)
    for kk in range(k, min(k + 4096, width) + 1):
        if width % kk == 0 and (width // kk) % 128 == 0:
            return width // kk
    return max_td  # ragged tail handled by Pallas masked stores


def constant_embedding(
    x: jax.Array,
    target_embedding: jax.Array,
    *,
    lane_budget_bytes: int = 512 * 1024,
    block_budget_bytes: int = 8 * 1024 * 1024,
) -> jax.Array:
    """Pallas equivalent of ConstantEmbedding.forward -> (B*S, 1, D)."""
    batch = x.shape[0]
    S, D = target_embedding.shape
    flat = S * D
    dtype = target_embedding.dtype
    itemsize = jnp.dtype(dtype).itemsize
    sublane = max(8, 32 // itemsize)  # 8 f32 / 16 bf16 / 32 int8

    # ---- lane-widened 2-D output view: (rows, width), width = m * flat -----
    m = _choose_widen_factor(batch, flat, itemsize, lane_budget_bytes, 1024)
    width = m * flat
    rows = batch // m

    emb_flat = target_embedding.reshape(-1)
    emb_row = (jnp.tile(emb_flat, m) if m > 1 else emb_flat).reshape(1, width)

    # ---- lane tile of the row (whole row when it fits the budget) ----------
    td = _choose_lane_tile(width, itemsize, lane_budget_bytes)
    num_lane_blocks = pl.cdiv(width, td)

    # ---- row blocks: amortize per-step overhead; keep >=2 blocks when
    #      possible so both v7x TensorCores get work ("parallel" axis) --------
    tb_target = max(1, block_budget_bytes // (td * itemsize))
    if rows > 1:
        tb_target = min(tb_target, pl.cdiv(rows, 2))
    if tb_target >= rows:
        tb = rows
    else:
        tb = max(sublane, (tb_target // sublane) * sublane)
        if tb >= rows:
            tb = rows
    num_row_blocks = pl.cdiv(rows, tb)

    block_bytes = tb * td * itemsize
    vmem_limit = int(
        min(48 << 20, max(32 << 20, 2 * block_bytes + 2 * td * itemsize + (4 << 20)))
    )

    cost = pl.CostEstimate(
        flops=0,
        transcendentals=0,
        bytes_accessed=int(batch * flat * itemsize + width * itemsize),
    )

    if num_lane_blocks == 1:
        # Embedding row stays resident in VMEM for the whole grid: constant
        # index_map means Pallas only DMAs it once.
        grid = (num_row_blocks,)
        in_spec = pl.BlockSpec((1, td), lambda i: (0, 0))
        out_spec = pl.BlockSpec((tb, td), lambda i: (i, 0))
        semantics = ("parallel",)
    else:
        # Row too wide to be resident: lane axis outermost so the input block
        # index is constant over the inner row loop (no per-step re-fetch).
        grid = (num_lane_blocks, num_row_blocks)
        in_spec = pl.BlockSpec((1, td), lambda j, i: (0, j))
        out_spec = pl.BlockSpec((tb, td), lambda j, i: (i, j))
        semantics = ("parallel", "parallel")

    out2d = pl.pallas_call(
        _const_embed_kernel,
        out_shape=jax.ShapeDtypeStruct((rows, width), dtype),
        grid=grid,
        in_specs=[in_spec],
        out_specs=out_spec,
        compiler_params=pltpu.CompilerParams(
            dimension_semantics=semantics,
            vmem_limit_bytes=vmem_limit,
        ),
        cost_estimate=cost,
    )(emb_row)

    # (rows, width) -> (B*S, 1, D) is a contiguous reshape and exactly matches
    # unsqueeze(1).repeat(B, 1, 1) semantics.
    return out2d.reshape(batch * S, 1, D)


if __name__ == "__main__":
    key = jax.random.PRNGKey(0)

    def check(batch, S, D, dtype, hw=(4, 16, 16), **kw):
        k1, k2 = jax.random.split(jax.random.fold_in(key, batch * 131 + S * 17 + D))
        emb = jax.random.normal(k1, (S, D), dtype=jnp.float32).astype(dtype)
        x = jax.random.normal(k2, (batch,) + hw, dtype=jnp.float32)
        out = jax.block_until_ready(constant_embedding(x, emb, **kw))
        ref = jnp.tile(emb[:, None, :], (batch, 1, 1))
        assert out.shape == (batch * S, 1, D), out.shape
        assert jnp.array_equal(out, ref), ("mismatch vs reference", batch, S, D, dtype)

    # Primary case from the module spec: x is (2, 4, 16, 16), embedding (1, 32).
    check(2, 1, 32, jnp.float32)
    # Lane-dense widened slab with a multi-block, megacore-splittable grid.
    check(512, 1, 32, jnp.float32)
    # bf16 path where the row is already a large multiple of 128 lanes.
    check(4, 8, 256, jnp.bfloat16)
    # Lane-tiled path (row forced over the per-block lane budget).
    check(4, 2, 1024, jnp.float32, lane_budget_bytes=2048)

    print("KERNEL_OK")
</pallas_src>

<mosaic_0001>
module attributes {stable_mosaic.version = 11 : i64} {
  func.func @_const_embed_kernel(%arg0: i32, %arg1: memref<1x64xf32, #tpu.memory_space<vmem>>, %arg2: memref<1x64xf32, #tpu.memory_space<vmem>>) attributes {dimension_semantics = [#tpu.dimension_semantics<parallel>], iteration_bounds = array<i64: 1>, scalar_prefetch = 0 : i64, scratch_operands = 0 : i64, tpu.core_type = #tpu.core_type<tc>, window_params = [{pipeline_mode = #tpu.pipeline_mode<synchronous>, transform_indices = @transform_0, window_bounds = array<i64: 1, 64>}, {transform_indices = @transform_1, window_bounds = array<i64: 1, 64>}]} {
    %c0 = arith.constant 0 : index
    %c0_0 = arith.constant 0 : index
    %0 = vector.load %arg1[%c0, %c0_0] : memref<1x64xf32, #tpu.memory_space<vmem>>, vector<1x64xf32>
    %c0_1 = arith.constant 0 : index
    %c0_2 = arith.constant 0 : index
    %1 = vector.load %arg2[%c0_1, %c0_2] : memref<1x64xf32, #tpu.memory_space<vmem>>, vector<1x64xf32>
    tpu.vector_store %arg2[%c0_1, %c0_2], %0 {strides = array<i32>} : memref<1x64xf32, #tpu.memory_space<vmem>>, vector<1x64xf32>,
    return
  }
  func.func @transform_0(%arg0: i32) -> (i32, i32) {
    %c0_i32 = arith.constant 0 : i32
    %c0_i32_0 = arith.constant 0 : i32
    %c0_i32_1 = arith.constant 0 : i32
    return %c0_i32, %c0_i32_0 : i32, i32
  }
  func.func @transform_1(%arg0: i32) -> (i32, i32) {
    %c0_i32 = arith.constant 0 : i32
    %c0_i32_0 = arith.constant 0 : i32
    return %arg0, %c0_i32 : i32, i32
  }
}

</mosaic_0001>

<llo_original>
// kernel: tpu_custom_call.1
$region0: #{tpu_custom_call.1}
  #allocation0 [shape = 'u32[]', space=smem, size = 0x4, offset = 0x4, fixed_abs, tag = 'smem constant byte address 0x4 - core index']
  #allocation1 [shape = 'u32[144,128]{1,0:T(1,128)}', space=vmem, size = 0x12000, scoped, tag = 'internal scratch']
  %s0 = inlined_call_operand.hbm [shape: f32[1,64], index: 0, kind: input, shape index: {}]
  %s1 = inlined_call_operand.hbm [shape: f32[1,64], index: 1, kind: output, shape index: {}]
  %s2 = sld [smem:[#allocation0]]
  $region18: #{tpu_custom_call.1} parent=0
    _
  %s4 = ssub.s32 1, %s2
  %s5 = scalar_select 0, %s4, %s2
  $region1: #{tpu_custom_call.1} parent=0
    #allocation2 [shape = 'u8[512]{0}', space=vmem, size = 0x400, scoped, tag = 'input window, operand 0, single buffered']
    #allocation3 [shape = 's32[1]{0}', space=sflag, size = 0x4, scoped, tag = 'scoped memory for tpu_custom_call.1']
    #allocation4 [shape = 's32[1]{0}', space=sflag, size = 0x4, scoped, tag = 'scoped memory for tpu_custom_call.1']
    #allocation5 [shape = 'u8[512]{0}', space=vmem, size = 0x400, scoped, tag = 'output window, operand 0, single buffered']
    %6 = vsyncpa [#allocation3], 0
    %7 = vsyncpa [#allocation4], 0
    // Predicated region
    $region2: #{tpu_custom_call.1} parent=1 // pred_check
      _
    $region3: #{tpu_custom_call.1} parent=1 // pred_check_branch
      %9 = sbr.rel (0) target = $region5
    $region4: #{tpu_custom_call.1} parent=1 // pred_region
      %s11 = ssub.s32 16, 16
      %12 = vsyncadd [#allocation3], %s11
      %s14 = sshll.u32 [#allocation2], 4
      %s15 = int_to_ptr.vmem [resolvable:$true] %s14
      %17 = dma.hbm_to_vmem [thread:$0]  %s0, 16, %s15, [#allocation3]
    $region5: #{tpu_custom_call.1} parent=1 // pred_fallthru
      _
    // Predicated region
    $region6: #{tpu_custom_call.1} parent=1 // pred_check
      _
    $region7: #{tpu_custom_call.1} parent=1 // pred_check_branch
      %19 = sbr.rel (0) target = $region9
    $region8: #{tpu_custom_call.1} parent=1 // pred_region
      %20 = dma.done [#allocation3], 16
    $region9: #{tpu_custom_call.1} parent=1 // pred_fallthru
      _
    %v21 = vld [vmem:[#allocation2] sm:$0x1]
    %vm22 = vcmask 516096
    %23 = vst.msk [vmem:[#allocation5] sm:$0x1] %vm22, %v21
    // Predicated region
    $region10: #{tpu_custom_call.1} parent=1 // pred_check
      _
    $region11: #{tpu_custom_call.1} parent=1 // pred_check_branch
      %25 = sbr.rel (0) target = $region13
    $region12: #{tpu_custom_call.1} parent=1 // pred_region
      %s27 = ssub.s32 16, 16
      %28 = vsyncadd [#allocation4], %s27
      %s30 = sshll.u32 [#allocation5], 4
      %s31 = int_to_ptr.vmem [resolvable:$true] %s30
      %33 = dma.vmem_to_hbm [thread:$0]  %s31, 16, %s1, [#allocation4]
    $region13: #{tpu_custom_call.1} parent=1 // pred_fallthru
      _
    // Predicated region
    $region14: #{tpu_custom_call.1} parent=1 // pred_check
      _
    $region15: #{tpu_custom_call.1} parent=1 // pred_check_branch
      %35 = sbr.rel (0) target = $region17
    $region16: #{tpu_custom_call.1} parent=1 // pred_region
      %36 = dma.done [#allocation4], 16
    $region17: #{tpu_custom_call.1} parent=1 // pred_fallthru
      _
    %37 = vsyncpa [#allocation3], 1
    %38 = vsyncpa [#allocation4], 1

</llo_original>
